<compile_context>
chip_gen: v7x
topology: tpu7x:2x2x1
jax: 0.10.0
libtpu: 0.0.40
codegen_flags: <defaults>
</compile_context>

<pallas_src>
import jax
import jax.numpy as jnp
import numpy as np
from jax.experimental import pallas as pl
from jax.experimental.pallas import tpu as pltpu

LANE = 128
SUBLANE = 8


def _round_up(x, m):
    return (x + m - 1) // m * m


def _actor_kernel(x_ref, w1_ref, b1_ref, w2_ref, b2_ref, w3_ref, b3_ref, act_ref):
    cd = w1_ref.dtype
    # state arrives f32; cast to the matmul compute dtype in-kernel (VPU slack).
    x = x_ref[...].astype(cd)
    # feature extractor: Linear -> ReLU -> Linear -> ReLU   (MXU + VPU, f32 acc)
    h = jnp.dot(x, w1_ref[...], preferred_element_type=jnp.float32)
    h = jnp.maximum(h + b1_ref[...], 0.0).astype(cd)
    h = jnp.dot(h, w2_ref[...], preferred_element_type=jnp.float32)
    h = jnp.maximum(h + b2_ref[...], 0.0).astype(cd)
    # output head: plain Linear (no activation / no tanh squash in this module)
    act = jnp.dot(h, w3_ref[...], preferred_element_type=jnp.float32) + b3_ref[...]
    act_ref[...] = act.astype(act_ref.dtype)   # bf16 store -> half the HBM writeback


def pack_params(params, compute_dtype=jnp.bfloat16):
    """Zero-pad hidden/action widths to 128-lane multiples; cast matmul weights."""
    w1, b1, w2, b2, w3, b3 = params
    S, H1 = w1.shape
    H2 = w2.shape[1]
    A = w3.shape[1]
    H1p, H2p, Ap = (_round_up(d, LANE) for d in (H1, H2, A))

    def pad2(a, rows, cols):
        r, c = a.shape
        return jnp.pad(a, ((0, rows - r), (0, cols - c)))

    packed = (
        pad2(w1, S, H1p).astype(compute_dtype),
        pad2(b1, 1, H1p).astype(jnp.float32),
        pad2(w2, H1p, H2p).astype(compute_dtype),
        pad2(b2, 1, H2p).astype(jnp.float32),
        pad2(w3, H2p, Ap).astype(compute_dtype),
        pad2(b3, 1, Ap).astype(jnp.float32),
    )
    return packed, A


def mlp_deterministic_actor_forward(state, packed_params, action_dim, *,
                                    batch_tile=None,
                                    out_dtype=jnp.bfloat16):
    """Returns `action` exactly like MLPDeterministicActor.forward (f32 result)."""
    w1, b1, w2, b2, w3, b3 = packed_params
    B, S = state.shape
    assert w1.shape[0] == S
    Ap = w3.shape[1]

    # Batch tile: whole (rounded-up) batch for small B -> single grid step, no
    # per-step overhead.  For large B, 512-row tiles (HBM-bound regime: bigger
    # tiles amortize the ~0.35us/step overhead; ~85% of roofline per reference).
    if batch_tile is None:
        tb = _round_up(B, SUBLANE) if B <= 1024 else 512
    else:
        tb = _round_up(batch_tile, SUBLANE)
    grid_b = pl.cdiv(B, tb)
    Bp = grid_b * tb

    x = state
    if Bp != B:
        x = jnp.pad(x, ((0, Bp - B), (0, 0)))   # ragged tail handled by padding

    full = lambda shape: pl.BlockSpec(shape, lambda i: (0, 0))  # constant index ->
    # Pallas keeps these VMEM-resident and skips re-DMA across grid steps.

    act_padded = pl.pallas_call(
        _actor_kernel,
        out_shape=jax.ShapeDtypeStruct((Bp, Ap), out_dtype),
        grid_spec=pltpu.PrefetchScalarGridSpec(
            num_scalar_prefetch=0,
            grid=(grid_b,),
            in_specs=[
                pl.BlockSpec((tb, S), lambda i: (i, 0)),   # f32 state tile (batch axis)
                full(w1.shape), full(b1.shape),
                full(w2.shape), full(b2.shape),
                full(w3.shape), full(b3.shape),
            ],
            out_specs=pl.BlockSpec((tb, Ap), lambda i: (i, 0)),  # lane-dense slab
        ),
        compiler_params=pltpu.CompilerParams(
            dimension_semantics=("parallel",),
        ),
    )(x, w1, b1, w2, b2, w3, b3)

    # Slice to the true action dim and give the caller f32 (tiny op on (B, A)).
    return act_padded[:B, :action_dim].astype(jnp.float32)


def _init_params(key, state_dim, net_arch, action_dim):
    """Deterministic synthetic init (small normals; stands in for orthogonal_init_)."""
    dims = [state_dim] + list(net_arch) + [action_dim]
    keys = jax.random.split(key, 2 * (len(dims) - 1))
    params = []
    for i in range(len(dims) - 1):
        fan_in, fan_out = dims[i], dims[i + 1]
        w = jax.random.normal(keys[2 * i], (fan_in, fan_out), jnp.float32) / jnp.sqrt(fan_in)
        b = 0.1 * jax.random.normal(keys[2 * i + 1], (1, fan_out), jnp.float32)
        params += [w, b]
    return tuple(params)


def _reference_forward(state, params, compute_dtype=jnp.bfloat16,
                       out_dtype=jnp.bfloat16):
    """Pure-JAX reference mirroring the kernel's bf16-compute / f32-accumulate math."""
    w1, b1, w2, b2, w3, b3 = params
    cd = compute_dtype
    h = jnp.dot(state.astype(cd), w1.astype(cd),
                preferred_element_type=jnp.float32) + b1
    h = jnp.maximum(h, 0.0)
    h = jnp.dot(h.astype(cd), w2.astype(cd),
                preferred_element_type=jnp.float32) + b2
    h = jnp.maximum(h, 0.0)
    act = jnp.dot(h.astype(cd), w3.astype(cd),
                  preferred_element_type=jnp.float32) + b3
    return act.astype(out_dtype).astype(jnp.float32)   # kernel stores bf16


if __name__ == "__main__":
    key = jax.random.PRNGKey(0)
    k_state, k_params = jax.random.split(key)

    # Small shapes consistent with the module; ragged batch to exercise padding.
    batch, state_dim, action_dim = 100, 16, 4
    net_arch = [32, 32]

    state = jax.random.normal(k_state, (batch, state_dim), jnp.float32)
    params = _init_params(k_params, state_dim, net_arch, action_dim)
    packed, a_dim = pack_params(params, compute_dtype=jnp.bfloat16)

    action_ref = np.asarray(_reference_forward(state, params))

    # 1) Default path: small batch -> single grid step (no per-step overhead).
    action = mlp_deterministic_actor_forward(state, packed, a_dim)
    action = jax.block_until_ready(action)
    np.testing.assert_allclose(np.asarray(action), action_ref, rtol=1e-2, atol=1e-2)

    # 2) Tiled path: force small tiles -> multi-step grid (validates pipelining
    #    + ragged-tail padding used for large batches).
    action_tiled = mlp_deterministic_actor_forward(state, packed, a_dim, batch_tile=40)
    action_tiled = jax.block_until_ready(action_tiled)
    np.testing.assert_allclose(np.asarray(action_tiled), action_ref, rtol=1e-2, atol=1e-2)

    print("KERNEL_OK")
</pallas_src>

<mosaic_0001>
module attributes {stable_mosaic.version = 11 : i64} {
  func.func @_actor_kernel(%arg0: i32, %arg1: memref<104x16xf32, #tpu.memory_space<vmem>>, %arg2: memref<16x128xbf16, #tpu.memory_space<vmem>>, %arg3: memref<1x128xf32, #tpu.memory_space<vmem>>, %arg4: memref<128x128xbf16, #tpu.memory_space<vmem>>, %arg5: memref<1x128xf32, #tpu.memory_space<vmem>>, %arg6: memref<128x128xbf16, #tpu.memory_space<vmem>>, %arg7: memref<1x128xf32, #tpu.memory_space<vmem>>, %arg8: memref<104x128xbf16, #tpu.memory_space<vmem>>) attributes {dimension_semantics = [#tpu.dimension_semantics<parallel>], iteration_bounds = array<i64: 1>, scalar_prefetch = 0 : i64, scratch_operands = 0 : i64, tpu.core_type = #tpu.core_type<tc>, window_params = [{transform_indices = @transform_0, window_bounds = array<i64: 104, 16>}, {pipeline_mode = #tpu.pipeline_mode<synchronous>, transform_indices = @transform_1, window_bounds = array<i64: 16, 128>}, {pipeline_mode = #tpu.pipeline_mode<synchronous>, transform_indices = @transform_2, window_bounds = array<i64: 1, 128>}, {pipeline_mode = #tpu.pipeline_mode<synchronous>, transform_indices = @transform_3, window_bounds = array<i64: 128, 128>}, {pipeline_mode = #tpu.pipeline_mode<synchronous>, transform_indices = @transform_4, window_bounds = array<i64: 1, 128>}, {pipeline_mode = #tpu.pipeline_mode<synchronous>, transform_indices = @transform_5, window_bounds = array<i64: 128, 128>}, {pipeline_mode = #tpu.pipeline_mode<synchronous>, transform_indices = @transform_6, window_bounds = array<i64: 1, 128>}, {transform_indices = @transform_7, window_bounds = array<i64: 104, 128>}]} {
    %c0 = arith.constant 0 : index
    %c0_0 = arith.constant 0 : index
    %0 = vector.load %arg1[%c0, %c0_0] : memref<104x16xf32, #tpu.memory_space<vmem>>, vector<104x16xf32>
    %1 = arith.truncf %0 : vector<104x16xf32> to vector<104x16xbf16>
    %c0_1 = arith.constant 0 : index
    %c0_2 = arith.constant 0 : index
    %2 = vector.load %arg2[%c0_1, %c0_2] : memref<16x128xbf16, #tpu.memory_space<vmem>>, vector<16x128xbf16>
    %cst = arith.constant dense<0.000000e+00> : vector<104x128xf32>
    %3 = tpu.matmul %1, %2, %cst {dimension_numbers = #tpu.dot_dimension_numbers<[1], [0], [0], [1], [0, 0, 1, 1], [], []>} : vector<104x16xbf16>, vector<16x128xbf16>, vector<104x128xf32> -> vector<104x128xf32>
    %c0_3 = arith.constant 0 : index
    %c0_4 = arith.constant 0 : index
    %4 = vector.load %arg3[%c0_3, %c0_4] : memref<1x128xf32, #tpu.memory_space<vmem>>, vector<1x128xf32>
    %5 = vector.broadcast %4 : vector<1x128xf32> to vector<104x128xf32>
    %6 = arith.addf %3, %5 : vector<104x128xf32>
    %cst_5 = arith.constant 0.000000e+00 : f32
    %7 = vector.broadcast %cst_5 : f32 to vector<104x128xf32>
    %8 = arith.maximumf %6, %7 : vector<104x128xf32>
    %9 = arith.truncf %8 : vector<104x128xf32> to vector<104x128xbf16>
    %c0_6 = arith.constant 0 : index
    %c0_7 = arith.constant 0 : index
    %10 = vector.load %arg4[%c0_6, %c0_7] : memref<128x128xbf16, #tpu.memory_space<vmem>>, vector<128x128xbf16>
    %cst_8 = arith.constant dense<0.000000e+00> : vector<104x128xf32>
    %11 = tpu.matmul %9, %10, %cst_8 {dimension_numbers = #tpu.dot_dimension_numbers<[1], [0], [0], [1], [0, 0, 1, 1], [], []>} : vector<104x128xbf16>, vector<128x128xbf16>, vector<104x128xf32> -> vector<104x128xf32>
    %c0_9 = arith.constant 0 : index
    %c0_10 = arith.constant 0 : index
    %12 = vector.load %arg5[%c0_9, %c0_10] : memref<1x128xf32, #tpu.memory_space<vmem>>, vector<1x128xf32>
    %13 = vector.broadcast %12 : vector<1x128xf32> to vector<104x128xf32>
    %14 = arith.addf %11, %13 : vector<104x128xf32>
    %cst_11 = arith.constant 0.000000e+00 : f32
    %15 = vector.broadcast %cst_11 : f32 to vector<104x128xf32>
    %16 = arith.maximumf %14, %15 : vector<104x128xf32>
    %17 = arith.truncf %16 : vector<104x128xf32> to vector<104x128xbf16>
    %c0_12 = arith.constant 0 : index
    %c0_13 = arith.constant 0 : index
    %18 = vector.load %arg6[%c0_12, %c0_13] : memref<128x128xbf16, #tpu.memory_space<vmem>>, vector<128x128xbf16>
    %cst_14 = arith.constant dense<0.000000e+00> : vector<104x128xf32>
    %19 = tpu.matmul %17, %18, %cst_14 {dimension_numbers = #tpu.dot_dimension_numbers<[1], [0], [0], [1], [0, 0, 1, 1], [], []>} : vector<104x128xbf16>, vector<128x128xbf16>, vector<104x128xf32> -> vector<104x128xf32>
    %c0_15 = arith.constant 0 : index
    %c0_16 = arith.constant 0 : index
    %20 = vector.load %arg7[%c0_15, %c0_16] : memref<1x128xf32, #tpu.memory_space<vmem>>, vector<1x128xf32>
    %21 = vector.broadcast %20 : vector<1x128xf32> to vector<104x128xf32>
    %22 = arith.addf %19, %21 : vector<104x128xf32>
    %23 = arith.truncf %22 : vector<104x128xf32> to vector<104x128xbf16>
    %c0_17 = arith.constant 0 : index
    %c0_18 = arith.constant 0 : index
    %24 = vector.load %arg8[%c0_17, %c0_18] : memref<104x128xbf16, #tpu.memory_space<vmem>>, vector<104x128xbf16>
    tpu.vector_store %arg8[%c0_17, %c0_18], %23 {strides = array<i32>} : memref<104x128xbf16, #tpu.memory_space<vmem>>, vector<104x128xbf16>,
    return
  }
  func.func @transform_0(%arg0: i32) -> (i32, i32) {
    %c0_i32 = arith.constant 0 : i32
    %c0_i32_0 = arith.constant 0 : i32
    return %arg0, %c0_i32 : i32, i32
  }
  func.func @transform_1(%arg0: i32) -> (i32, i32) {
    %c0_i32 = arith.constant 0 : i32
    %c0_i32_0 = arith.constant 0 : i32
    %c0_i32_1 = arith.constant 0 : i32
    return %c0_i32, %c0_i32_0 : i32, i32
  }
  func.func @transform_2(%arg0: i32) -> (i32, i32) {
    %c0_i32 = arith.constant 0 : i32
    %c0_i32_0 = arith.constant 0 : i32
    %c0_i32_1 = arith.constant 0 : i32
    return %c0_i32, %c0_i32_0 : i32, i32
  }
  func.func @transform_3(%arg0: i32) -> (i32, i32) {
    %c0_i32 = arith.constant 0 : i32
    %c0_i32_0 = arith.constant 0 : i32
    %c0_i32_1 = arith.constant 0 : i32
    return %c0_i32, %c0_i32_0 : i32, i32
  }
  func.func @transform_4(%arg0: i32) -> (i32, i32) {
    %c0_i32 = arith.constant 0 : i32
    %c0_i32_0 = arith.constant 0 : i32
    %c0_i32_1 = arith.constant 0 : i32
    return %c0_i32, %c0_i32_0 : i32, i32
  }
  func.func @transform_5(%arg0: i32) -> (i32, i32) {
    %c0_i32 = arith.constant 0 : i32
    %c0_i32_0 = arith.constant 0 : i32
    %c0_i32_1 = arith.constant 0 : i32
    return %c0_i32, %c0_i32_0 : i32, i32
  }
  func.func @transform_6(%arg0: i32) -> (i32, i32) {
    %c0_i32 = arith.constant 0 : i32
    %c0_i32_0 = arith.constant 0 : i32
    %c0_i32_1 = arith.constant 0 : i32
    return %c0_i32, %c0_i32_0 : i32, i32
  }
  func.func @transform_7(%arg0: i32) -> (i32, i32) {
    %c0_i32 = arith.constant 0 : i32
    %c0_i32_0 = arith.constant 0 : i32
    return %arg0, %c0_i32 : i32, i32
  }
}

</mosaic_0001>

<llo_original>
// kernel: tpu_custom_call.1
$region0: #{tpu_custom_call.1}
  #allocation0 [shape = 'u32[]', space=smem, size = 0x4, offset = 0x4, fixed_abs, tag = 'smem constant byte address 0x4 - core index']
  #allocation1 [shape = 'u32[144,128]{1,0:T(1,128)}', space=vmem, size = 0x12000, scoped, tag = 'internal scratch']
  %s0 = inlined_call_operand.vmem [shape: f32[104,16], index: 0, kind: input, shape index: {}]
  %s1 = inlined_call_operand.hbm [shape: bf16[16,128], index: 1, kind: input, shape index: {}]
  %s2 = inlined_call_operand.vmem [shape: f32[1,128], index: 2, kind: input, shape index: {}]
  %s3 = inlined_call_operand.vmem [shape: bf16[128,128], index: 3, kind: input, shape index: {}]
  %s4 = inlined_call_operand.vmem [shape: f32[1,128], index: 4, kind: input, shape index: {}]
  %s5 = inlined_call_operand.vmem [shape: bf16[128,128], index: 5, kind: input, shape index: {}]
  %s6 = inlined_call_operand.vmem [shape: f32[1,128], index: 6, kind: input, shape index: {}]
  %s7 = inlined_call_operand.hbm [shape: bf16[104,128], index: 7, kind: output, shape index: {}]
  %s8 = sld [smem:[#allocation0]]
  $region42: #{tpu_custom_call.1} parent=0
    _
  %s10 = ssub.s32 1, %s8
  %s11 = scalar_select 0, %s10, %s8
  $region1: #{tpu_custom_call.1} parent=0
    #allocation2 [shape = 'u8[4096]{0}', space=vmem, size = 0x1000, scoped, tag = 'input window, operand 1, single buffered']
    #allocation3 [shape = 's32[1]{0}', space=sflag, size = 0x4, scoped, tag = 'scoped memory for tpu_custom_call.1']
    #allocation4 [shape = 's32[1]{0}', space=sflag, size = 0x4, scoped, tag = 'scoped memory for tpu_custom_call.1']
    #allocation5 [shape = 'u8[26624]{0}', space=vmem, size = 0x6800, scoped, tag = 'output window, operand 0, single buffered']
    %12 = vsyncpa [#allocation3], 0
    %13 = vsyncpa [#allocation4], 0
    // Predicated region
    $region2: #{tpu_custom_call.1} parent=1 // pred_check
      _
    $region3: #{tpu_custom_call.1} parent=1 // pred_check_branch
      %15 = sbr.rel (0) target = $region5
    $region4: #{tpu_custom_call.1} parent=1 // pred_region
      _
    $region5: #{tpu_custom_call.1} parent=1 // pred_fallthru
      _
    // Predicated region
    $region6: #{tpu_custom_call.1} parent=1 // pred_check
      _
    $region7: #{tpu_custom_call.1} parent=1 // pred_check_branch
      %17 = sbr.rel (0) target = $region9
    $region8: #{tpu_custom_call.1} parent=1 // pred_region
      %s19 = ssub.s32 128, 128
      %20 = vsyncadd [#allocation3], %s19
      %s21 = sshll.u32 [#allocation2], 4
      %s22 = int_to_ptr.vmem [resolvable:$true] %s21
      %27 = dma.hbm_to_vmem [thread:$0]  %s1, 128, %s22, [#allocation3], 64, 64, 4
    $region9: #{tpu_custom_call.1} parent=1 // pred_fallthru
      _
    // Predicated region
    $region10: #{tpu_custom_call.1} parent=1 // pred_check
      _
    $region11: #{tpu_custom_call.1} parent=1 // pred_check_branch
      %29 = sbr.rel (0) target = $region13
    $region12: #{tpu_custom_call.1} parent=1 // pred_region
      _
    $region13: #{tpu_custom_call.1} parent=1 // pred_fallthru
      _
    // Predicated region
    $region14: #{tpu_custom_call.1} parent=1 // pred_check
      _
    $region15: #{tpu_custom_call.1} parent=1 // pred_check_branch
      %31 = sbr.rel (0) target = $region17
    $region16: #{tpu_custom_call.1} parent=1 // pred_region
      _
    $region17: #{tpu_custom_call.1} parent=1 // pred_fallthru
      _
    // Predicated region
    $region18: #{tpu_custom_call.1} parent=1 // pred_check
      _
    $region19: #{tpu_custom_call.1} parent=1 // pred_check_branch
      %33 = sbr.rel (0) target = $region21
    $region20: #{tpu_custom_call.1} parent=1 // pred_region
      _
    $region21: #{tpu_custom_call.1} parent=1 // pred_fallthru
      _
    // Predicated region
    $region22: #{tpu_custom_call.1} parent=1 // pred_check
      _
    $region23: #{tpu_custom_call.1} parent=1 // pred_check_branch
      %35 = sbr.rel (0) target = $region25
    $region24: #{tpu_custom_call.1} parent=1 // pred_region
      _
    $region25: #{tpu_custom_call.1} parent=1 // pred_fallthru
      _
    // Predicated region
    $region26: #{tpu_custom_call.1} parent=1 // pred_check
      _
    $region27: #{tpu_custom_call.1} parent=1 // pred_check_branch
      %37 = sbr.rel (0) target = $region29
    $region28: #{tpu_custom_call.1} parent=1 // pred_region
      _
    $region29: #{tpu_custom_call.1} parent=1 // pred_fallthru
      _
    // Predicated region
    $region30: #{tpu_custom_call.1} parent=1 // pred_check
      _
    $region31: #{tpu_custom_call.1} parent=1 // pred_check_branch
      %39 = sbr.rel (0) target = $region33
    $region32: #{tpu_custom_call.1} parent=1 // pred_region
      %40 = dma.done [#allocation3], 128
    $region33: #{tpu_custom_call.1} parent=1 // pred_fallthru
      _
    %v42 = vld [vmem:[%s0] sm:$0xff]
    %v43 = vld [vmem:[%s0 + $0x8] sm:$0xff]
    %v44 = vld [vmem:[%s0 + $0x10] sm:$0xff]
    %v45 = vld [vmem:[%s0 + $0x18] sm:$0xff]
    %v46 = vld [vmem:[%s0 + $0x20] sm:$0xff]
    %v47 = vld [vmem:[%s0 + $0x28] sm:$0xff]
    %v48 = vld [vmem:[%s0 + $0x30] sm:$0xff]
    %v49 = vld [vmem:[%s0 + $0x38] sm:$0xff]
    %v50 = vld [vmem:[%s0 + $0x40] sm:$0xff]
    %v51 = vld [vmem:[%s0 + $0x48] sm:$0xff]
    %v52 = vld [vmem:[%s0 + $0x50] sm:$0xff]
    %v53 = vld [vmem:[%s0 + $0x58] sm:$0xff]
    %v54 = vld [vmem:[%s0 + $0x60] sm:$0xff]
    %v55 = vpack.c.bf16 %v43, %v42
    %v56 = vpack.c.bf16 %v45, %v44
    %v57 = vpack.c.bf16 %v47, %v46
    %v58 = vpack.c.bf16 %v49, %v48
    %v59 = vpack.c.bf16 %v51, %v50
    %v60 = vpack.c.bf16 %v53, %v52
    %v61 = vpack.c.bf16 %v54, %v54
    %v62 = vld [vmem:[#allocation2] sm:$0xf]
    %v63 = vld [vmem:[#allocation2 + $0x4] sm:$0xf]
    %v64 = vld [vmem:[%s2] sm:$0x1]
    %v66 = vlaneseq
    %v67 = vshrl.u32 %v66, 7
    %v68 = vsub.s32 0, %v67
    %v69 = vrot.slane %v64, %v68
    %v73 = vunpack.c.l.b16 %v62
    %v74 = vunpack.c.l.b16 %v63
    %v75 = vpack.c.b16 %v74, %v73
    %vm77 = vcmask 130048
    %v79 = vsel %vm77, %v55, 0
    %v82 = vsel %vm77, %v56, 0
    %v85 = vsel %vm77, %v57, 0
    %v88 = vsel %vm77, %v58, 0
    %v91 = vsel %vm77, %v59, 0
    %v94 = vsel %vm77, %v60, 0
    %v97 = vsel %vm77, %v61, 0
    %99 = vmatprep.subr.bf16.mxu0 0
    %100 = vmatpush1.bf16.msra.mxu0 %v75
    %101 = vmatprep.subr.bf16.mxu0 0
    %102 = vmatpush1.bf16.msra.mxu0 0
    %103 = vmatprep.subr.bf16.mxu0 0
    %104 = vmatpush1.bf16.msra.mxu0 0
    %105 = vmatprep.subr.bf16.mxu0 0
    %106 = vmatpush1.bf16.msra.mxu0 0
    %107 = vmatprep.subr.bf16.mxu0 0
    %108 = vmatpush1.bf16.msra.mxu0 0
    %109 = vmatprep.subr.bf16.mxu0 0
    %110 = vmatpush1.bf16.msra.mxu0 0
    %111 = vmatprep.subr.bf16.mxu0 0
    %112 = vmatpush1.bf16.msra.mxu0 0
    %113 = vmatprep.subr.bf16.mxu0 0
    %114 = vmatpush1.bf16.msra.mxu0 0
    %115 = vmatprep.subr.bf16.mxu0 0
    %116 = vmatpush1.bf16.msra.mxu0 0
    %117 = vmatprep.subr.bf16.mxu0 0
    %118 = vmatpush1.bf16.msra.mxu0 0
    %119 = vmatprep.subr.bf16.mxu0 0
    %120 = vmatpush1.bf16.msra.mxu0 0
    %121 = vmatprep.subr.bf16.mxu0 0
    %122 = vmatpush1.bf16.msra.mxu0 0
    %123 = vmatprep.subr.bf16.mxu0 0
    %124 = vmatpush1.bf16.msra.mxu0 0
    %125 = vmatprep.subr.bf16.mxu0 0
    %126 = vmatpush1.bf16.msra.mxu0 0
    %127 = vmatprep.subr.bf16.mxu0 0
    %128 = vmatpush1.bf16.msra.mxu0 0
    %129 = vmatprep.subr.bf16.mxu0 0
    %130 = vmatpush1.bf16.msra.mxu0 0
    %131 = vmatprep.mubr.bf16.mxu0 0
    %132 = vmatmul.mubr.bf16.gmra.mrb[0].mxu0 %v79
    %v133 = vpop.f32.mrb[0].mxu0
    %v134 = vadd.f32 %v69, %v133
    %v135 = vpop.f32.mrb[0].mxu0
    %v136 = vpop.f32.mrb[0].mxu0
    %v137 = vadd.f32 %v69, %v136
    %v138 = vpop.f32.mrb[0].mxu0
    %139 = vmatprep.mubr.bf16.mxu0 0
    %140 = vmatmul.mubr.bf16.gmra.mrb[0].mxu0 %v82
    %v141 = vpop.f32.mrb[0].mxu0
    %v142 = vadd.f32 %v69, %v141
    %v143 = vpop.f32.mrb[0].mxu0
    %v144 = vpop.f32.mrb[0].mxu0
    %v145 = vadd.f32 %v69, %v144
    %v146 = vpop.f32.mrb[0].mxu0
    %147 = vmatprep.mubr.bf16.mxu0 0
    %148 = vmatmul.mubr.bf16.gmra.mrb[0].mxu0 %v85
    %v149 = vpop.f32.mrb[0].mxu0
    %v150 = vadd.f32 %v69, %v149
    %v151 = vpop.f32.mrb[0].mxu0
    %v152 = vpop.f32.mrb[0].mxu0
    %v153 = vadd.f32 %v69, %v152
    %v154 = vpop.f32.mrb[0].mxu0
    %155 = vmatprep.mubr.bf16.mxu0 0
    %156 = vmatmul.mubr.bf16.gmra.mrb[0].mxu0 %v88
    %v157 = vpop.f32.mrb[0].mxu0
    %v158 = vadd.f32 %v69, %v157
    %v159 = vpop.f32.mrb[0].mxu0
    %v160 = vpop.f32.mrb[0].mxu0
    %v161 = vadd.f32 %v69, %v160
    %v162 = vpop.f32.mrb[0].mxu0
    %163 = vmatprep.mubr.bf16.mxu0 0
    %164 = vmatmul.mubr.bf16.gmra.mrb[0].mxu0 %v91
    %v165 = vpop.f32.mrb[0].mxu0
    %v166 = vadd.f32 %v69, %v165
    %v167 = vpop.f32.mrb[0].mxu0
    %v168 = vpop.f32.mrb[0].mxu0
    %v169 = vadd.f32 %v69, %v168
    %v170 = vpop.f32.mrb[0].mxu0
    %171 = vmatprep.mubr.bf16.mxu0 0
    %172 = vmatmul.mubr.bf16.gmra.mrb[0].mxu0 %v94
    %v173 = vpop.f32.mrb[0].mxu0
    %v174 = vadd.f32 %v69, %v173
    %v175 = vpop.f32.mrb[0].mxu0
    %v176 = vpop.f32.mrb[0].mxu0
    %v177 = vadd.f32 %v69, %v176
    %v178 = vpop.f32.mrb[0].mxu0
    %179 = vmatprep.mubr.bf16.mxu0 0
    %180 = vmatmul.mubr.bf16.gmra.mrb[0].mxu0 %v97
    %v181 = vpop.f32.mrb[0].mxu0
    %v182 = vadd.f32 %v69, %v181
    %v183 = vpop.f32.mrb[0].mxu0
    %v184 = vpop.f32.mrb[0].mxu0
    %v185 = vpop.f32.mrb[0].mxu0
    %186 = vdwg.mxu0
    %v187 = vmax.f32 %v134, 0.0
    %v188 = vmax.f32 %v137, 0.0
    %v189 = vmax.f32 %v142, 0.0
    %v190 = vmax.f32 %v145, 0.0
    %v191 = vmax.f32 %v150, 0.0
    %v192 = vmax.f32 %v153, 0.0
    %v193 = vmax.f32 %v158, 0.0
    %v194 = vmax.f32 %v161, 0.0
    %v195 = vmax.f32 %v166, 0.0
    %v196 = vmax.f32 %v169, 0.0
    %v197 = vmax.f32 %v174, 0.0
    %v198 = vmax.f32 %v177, 0.0
    %v199 = vmax.f32 %v182, 0.0
    %v200 = vpack.c.bf16 %v188, %v187
    %v201 = vpack.c.bf16 %v190, %v189
    %v202 = vpack.c.bf16 %v192, %v191
    %v203 = vpack.c.bf16 %v194, %v193
    %v204 = vpack.c.bf16 %v196, %v195
    %v205 = vpack.c.bf16 %v198, %v197
    %v206 = vpack.c.bf16 %v199, %v199
    %v207 = vld [vmem:[%s3] sm:$0xf]
    %v208 = vld [vmem:[%s3 + $0x4] sm:$0xf]
    %v209 = vld [vmem:[%s3 + $0x8] sm:$0xf]
    %v210 = vld [vmem:[%s3 + $0xc] sm:$0xf]
    %v211 = vld [vmem:[%s3 + $0x10] sm:$0xf]
    %v212 = vld [vmem:[%s3 + $0x14] sm:$0xf]
    %v213 = vld [vmem:[%s3 + $0x18] sm:$0xf]
    %v214 = vld [vmem:[%s3 + $0x1c] sm:$0xf]
    %v215 = vld [vmem:[%s3 + $0x20] sm:$0xf]
    %v216 = vld [vmem:[%s3 + $0x24] sm:$0xf]
    %v217 = vld [vmem:[%s3 + $0x28] sm:$0xf]
    %v218 = vld [vmem:[%s3 + $0x2c] sm:$0xf]
    %v219 = vld [vmem:[%s3 + $0x30] sm:$0xf]
    %v220 = vld [vmem:[%s3 + $0x34] sm:$0xf]
    %v221 = vld [vmem:[%s3 + $0x38] sm:$0xf]
    %v222 = vld [vmem:[%s3 + $0x3c] sm:$0xf]
    %v223 = vld [vmem:[%s4] sm:$0x1]
    %v225 = vlaneseq
    %v226 = vshrl.u32 %v225, 7
    %v227 = vsub.s32 0, %v226
    %v228 = vrot.slane %v223, %v227
    %v246 = vunpack.c.l.b16 %v207
    %v247 = vunpack.c.l.b16 %v208
    %v248 = vunpack.c.l.b16 %v209
    %v249 = vunpack.c.l.b16 %v210
    %v250 = vunpack.c.l.b16 %v211
    %v251 = vunpack.c.l.b16 %v212
    %v252 = vunpack.c.l.b16 %v213
    %v253 = vunpack.c.l.b16 %v214
    %v254 = vunpack.c.l.b16 %v215
    %v255 = vunpack.c.l.b16 %v216
    %v256 = vunpack.c.l.b16 %v217
    %v257 = vunpack.c.l.b16 %v218
    %v258 = vunpack.c.l.b16 %v219
    %v259 = vunpack.c.l.b16 %v220
    %v260 = vunpack.c.l.b16 %v221
    %v261 = vunpack.c.l.b16 %v222
    %v262 = vpack.c.b16 %v247, %v246
    %v263 = vpack.c.b16 %v249, %v248
    %v264 = vpack.c.b16 %v251, %v250
    %v265 = vpack.c.b16 %v253, %v252
    %v266 = vpack.c.b16 %v255, %v254
    %v267 = vpack.c.b16 %v257, %v256
    %v268 = vpack.c.b16 %v259, %v258
    %v269 = vpack.c.b16 %v261, %v260
    %278 = vmatprep.subr.bf16.mxu0 0
    %279 = vmatpush1.bf16.msra.mxu0 %v262
    %280 = vmatprep.subr.bf16.mxu0 0
    %281 = vmatpush1.bf16.msra.mxu0 %v263
    %282 = vmatprep.subr.bf16.mxu0 0
    %283 = vmatpush1.bf16.msra.mxu0 %v264
    %284 = vmatprep.subr.bf16.mxu0 0
    %285 = vmatpush1.bf16.msra.mxu0 %v265
    %286 = vmatprep.subr.bf16.mxu0 0
    %287 = vmatpush1.bf16.msra.mxu0 %v266
    %288 = vmatprep.subr.bf16.mxu0 0
    %289 = vmatpush1.bf16.msra.mxu0 %v267
    %290 = vmatprep.subr.bf16.mxu0 0
    %291 = vmatpush1.bf16.msra.mxu0 %v268
    %292 = vmatprep.subr.bf16.mxu0 0
    %293 = vmatpush1.bf16.msra.mxu0 %v269
    %294 = vmatprep.subr.bf16.mxu0 0
    %295 = vmatpush1.bf16.msra.mxu0 0
    %296 = vmatprep.subr.bf16.mxu0 0
    %297 = vmatpush1.bf16.msra.mxu0 0
    %298 = vmatprep.subr.bf16.mxu0 0
    %299 = vmatpush1.bf16.msra.mxu0 0
    %300 = vmatprep.subr.bf16.mxu0 0
    %301 = vmatpush1.bf16.msra.mxu0 0
    %302 = vmatprep.subr.bf16.mxu0 0
    %303 = vmatpush1.bf16.msra.mxu0 0
    %304 = vmatprep.subr.bf16.mxu0 0
    %305 = vmatpush1.bf16.msra.mxu0 0
    %306 = vmatprep.subr.bf16.mxu0 0
    %307 = vmatpush1.bf16.msra.mxu0 0
    %308 = vmatprep.subr.bf16.mxu0 0
    %309 = vmatpush1.bf16.msra.mxu0 0
    %310 = vmatprep.mubr.bf16.mxu0 0
    %311 = vmatmul.mubr.bf16.gmra.mrb[0].mxu0 %v200
    %v312 = vpop.f32.mrb[0].mxu0
    %v313 = vadd.f32 %v228, %v312
    %v314 = vpop.f32.mrb[0].mxu0
    %v315 = vpop.f32.mrb[0].mxu0
    %v316 = vadd.f32 %v228, %v315
    %v317 = vpop.f32.mrb[0].mxu0
    %318 = vmatprep.mubr.bf16.mxu0 0
    %319 = vmatmul.mubr.bf16.gmra.mrb[0].mxu0 %v201
    %v320 = vpop.f32.mrb[0].mxu0
    %v321 = vadd.f32 %v228, %v320
    %v322 = vpop.f32.mrb[0].mxu0
    %v323 = vpop.f32.mrb[0].mxu0
    %v324 = vadd.f32 %v228, %v323
    %v325 = vpop.f32.mrb[0].mxu0
    %326 = vmatprep.mubr.bf16.mxu0 0
    %327 = vmatmul.mubr.bf16.gmra.mrb[0].mxu0 %v202
    %v328 = vpop.f32.mrb[0].mxu0
    %v329 = vadd.f32 %v228, %v328
    %v330 = vpop.f32.mrb[0].mxu0
    %v331 = vpop.f32.mrb[0].mxu0
    %v332 = vadd.f32 %v228, %v331
    %v333 = vpop.f32.mrb[0].mxu0
    %334 = vmatprep.mubr.bf16.mxu0 0
    %335 = vmatmul.mubr.bf16.gmra.mrb[0].mxu0 %v203
    %v336 = vpop.f32.mrb[0].mxu0
    %v337 = vadd.f32 %v228, %v336
    %v338 = vpop.f32.mrb[0].mxu0
    %v339 = vpop.f32.mrb[0].mxu0
    %v340 = vadd.f32 %v228, %v339
    %v341 = vpop.f32.mrb[0].mxu0
    %342 = vmatprep.mubr.bf16.mxu0 0
    %343 = vmatmul.mubr.bf16.gmra.mrb[0].mxu0 %v204
    %v344 = vpop.f32.mrb[0].mxu0
    %v345 = vadd.f32 %v228, %v344
    %v346 = vpop.f32.mrb[0].mxu0
    %v347 = vpop.f32.mrb[0].mxu0
    %v348 = vadd.f32 %v228, %v347
    %v349 = vpop.f32.mrb[0].mxu0
    %350 = vmatprep.mubr.bf16.mxu0 0
    %351 = vmatmul.mubr.bf16.gmra.mrb[0].mxu0 %v205
    %v352 = vpop.f32.mrb[0].mxu0
    %v353 = vadd.f32 %v228, %v352
    %v354 = vpop.f32.mrb[0].mxu0
    %v355 = vpop.f32.mrb[0].mxu0
    %v356 = vadd.f32 %v228, %v355
    %v357 = vpop.f32.mrb[0].mxu0
    %358 = vmatprep.mubr.bf16.mxu0 0
    %359 = vmatmul.mubr.bf16.gmra.mrb[0].mxu0 %v206
    %v360 = vpop.f32.mrb[0].mxu0
    %v361 = vadd.f32 %v228, %v360
    %v362 = vpop.f32.mrb[0].mxu0
    %v363 = vpop.f32.mrb[0].mxu0
    %v364 = vpop.f32.mrb[0].mxu0
    %365 = vdwg.mxu0
    %v366 = vmax.f32 %v313, 0.0
    %v367 = vmax.f32 %v316, 0.0
    %v368 = vmax.f32 %v321, 0.0
    %v369 = vmax.f32 %v324, 0.0
    %v370 = vmax.f32 %v329, 0.0
    %v371 = vmax.f32 %v332, 0.0
    %v372 = vmax.f32 %v337, 0.0
    %v373 = vmax.f32 %v340, 0.0
    %v374 = vmax.f32 %v345, 0.0
    %v375 = vmax.f32 %v348, 0.0
    %v376 = vmax.f32 %v353, 0.0
    %v377 = vmax.f32 %v356, 0.0
    %v378 = vmax.f32 %v361, 0.0
    %v379 = vpack.c.bf16 %v367, %v366
    %v380 = vpack.c.bf16 %v369, %v368
    %v381 = vpack.c.bf16 %v371, %v370
    %v382 = vpack.c.bf16 %v373, %v372
    %v383 = vpack.c.bf16 %v375, %v374
    %v384 = vpack.c.bf16 %v377, %v376
    %v385 = vpack.c.bf16 %v378, %v378
    %v386 = vld [vmem:[%s5] sm:$0xf]
    %v387 = vld [vmem:[%s5 + $0x4] sm:$0xf]
    %v388 = vld [vmem:[%s5 + $0x8] sm:$0xf]
    %v389 = vld [vmem:[%s5 + $0xc] sm:$0xf]
    %v390 = vld [vmem:[%s5 + $0x10] sm:$0xf]
    %v391 = vld [vmem:[%s5 + $0x14] sm:$0xf]
    %v392 = vld [vmem:[%s5 + $0x18] sm:$0xf]
    %v393 = vld [vmem:[%s5 + $0x1c] sm:$0xf]
    %v394 = vld [vmem:[%s5 + $0x20] sm:$0xf]
    %v395 = vld [vmem:[%s5 + $0x24] sm:$0xf]
    %v396 = vld [vmem:[%s5 + $0x28] sm:$0xf]
    %v397 = vld [vmem:[%s5 + $0x2c] sm:$0xf]
    %v398 = vld [vmem:[%s5 + $0x30] sm:$0xf]
    %v399 = vld [vmem:[%s5 + $0x34] sm:$0xf]
    %v400 = vld [vmem:[%s5 + $0x38] sm:$0xf]
    %v401 = vld [vmem:[%s5 + $0x3c] sm:$0xf]
    %v402 = vld [vmem:[%s6] sm:$0x1]
    %v404 = vlaneseq
    %v405 = vshrl.u32 %v404, 7
    %v406 = vsub.s32 0, %v405
    %v407 = vrot.slane %v402, %v406
    %v425 = vunpack.c.l.b16 %v386
    %v426 = vunpack.c.l.b16 %v387
    %v427 = vunpack.c.l.b16 %v388
    %v428 = vunpack.c.l.b16 %v389
    %v429 = vunpack.c.l.b16 %v390
    %v430 = vunpack.c.l.b16 %v391
    %v431 = vunpack.c.l.b16 %v392
    %v432 = vunpack.c.l.b16 %v393
    %v433 = vunpack.c.l.b16 %v394
    %v434 = vunpack.c.l.b16 %v395
    %v435 = vunpack.c.l.b16 %v396
    %v436 = vunpack.c.l.b16 %v397
    %v437 = vunpack.c.l.b16 %v398
    %v438 = vunpack.c.l.b16 %v399
    %v439 = vunpack.c.l.b16 %v400
    %v440 = vunpack.c.l.b16 %v401
    %v441 = vpack.c.b16 %v426, %v425
    %v442 = vpack.c.b16 %v428, %v427
    %v443 = vpack.c.b16 %v430, %v429
    %v444 = vpack.c.b16 %v432, %v431
    %v445 = vpack.c.b16 %v434, %v433
    %v446 = vpack.c.b16 %v436, %v435
    %v447 = vpack.c.b16 %v438, %v437
    %v448 = vpack.c.b16 %v440, %v439
    %457 = vmatprep.subr.bf16.mxu0 0
    %458 = vmatpush1.bf16.msra.mxu0 %v441
    %459 = vmatprep.subr.bf16.mxu0 0
    %460 = vmatpush1.bf16.msra.mxu0 %v442
    %461 = vmatprep.subr.bf16.mxu0 0
    %462 = vmatpush1.bf16.msra.mxu0 %v443
    %463 = vmatprep.subr.bf16.mxu0 0
    %464 = vmatpush1.bf16.msra.mxu0 %v444
    %465 = vmatprep.subr.bf16.mxu0 0
    %466 = vmatpush1.bf16.msra.mxu0 %v445
    %467 = vmatprep.subr.bf16.mxu0 0
    %468 = vmatpush1.bf16.msra.mxu0 %v446
    %469 = vmatprep.subr.bf16.mxu0 0
    %470 = vmatpush1.bf16.msra.mxu0 %v447
    %471 = vmatprep.subr.bf16.mxu0 0
    %472 = vmatpush1.bf16.msra.mxu0 %v448
    %473 = vmatprep.subr.bf16.mxu0 0
    %474 = vmatpush1.bf16.msra.mxu0 0
    %475 = vmatprep.subr.bf16.mxu0 0
    %476 = vmatpush1.bf16.msra.mxu0 0
    %477 = vmatprep.subr.bf16.mxu0 0
    %478 = vmatpush1.bf16.msra.mxu0 0
    %479 = vmatprep.subr.bf16.mxu0 0
    %480 = vmatpush1.bf16.msra.mxu0 0
    %481 = vmatprep.subr.bf16.mxu0 0
    %482 = vmatpush1.bf16.msra.mxu0 0
    %483 = vmatprep.subr.bf16.mxu0 0
    %484 = vmatpush1.bf16.msra.mxu0 0
    %485 = vmatprep.subr.bf16.mxu0 0
    %486 = vmatpush1.bf16.msra.mxu0 0
    %487 = vmatprep.subr.bf16.mxu0 0
    %488 = vmatpush1.bf16.msra.mxu0 0
    %489 = vmatprep.mubr.bf16.mxu0 0
    %490 = vmatmul.mubr.bf16.gmra.mrb[0].mxu0 %v379
    %v491 = vpop.f32.mrb[0].mxu0
    %v492 = vadd.f32 %v407, %v491
    %v493 = vpop.f32.mrb[0].mxu0
    %v494 = vpop.f32.mrb[0].mxu0
    %v495 = vadd.f32 %v407, %v494
    %v496 = vpop.f32.mrb[0].mxu0
    %497 = vmatprep.mubr.bf16.mxu0 0
    %498 = vmatmul.mubr.bf16.gmra.mrb[0].mxu0 %v380
    %v499 = vpop.f32.mrb[0].mxu0
    %v500 = vadd.f32 %v407, %v499
    %v501 = vpop.f32.mrb[0].mxu0
    %v502 = vpop.f32.mrb[0].mxu0
    %v503 = vadd.f32 %v407, %v502
    %v504 = vpop.f32.mrb[0].mxu0
    %505 = vmatprep.mubr.bf16.mxu0 0
    %506 = vmatmul.mubr.bf16.gmra.mrb[0].mxu0 %v381
    %v507 = vpop.f32.mrb[0].mxu0
    %v508 = vadd.f32 %v407, %v507
    %v509 = vpop.f32.mrb[0].mxu0
    %v510 = vpop.f32.mrb[0].mxu0
    %v511 = vadd.f32 %v407, %v510
    %v512 = vpop.f32.mrb[0].mxu0
    %513 = vmatprep.mubr.bf16.mxu0 0
    %514 = vmatmul.mubr.bf16.gmra.mrb[0].mxu0 %v382
    %v515 = vpop.f32.mrb[0].mxu0
    %v516 = vadd.f32 %v407, %v515
    %v517 = vpop.f32.mrb[0].mxu0
    %v518 = vpop.f32.mrb[0].mxu0
    %v519 = vadd.f32 %v407, %v518
    %v520 = vpop.f32.mrb[0].mxu0
    %521 = vmatprep.mubr.bf16.mxu0 0
    %522 = vmatmul.mubr.bf16.gmra.mrb[0].mxu0 %v383
    %v523 = vpop.f32.mrb[0].mxu0
    %v524 = vadd.f32 %v407, %v523
    %v525 = vpop.f32.mrb[0].mxu0
    %v526 = vpop.f32.mrb[0].mxu0
    %v527 = vadd.f32 %v407, %v526
    %v528 = vpop.f32.mrb[0].mxu0
    %529 = vmatprep.mubr.bf16.mxu0 0
    %530 = vmatmul.mubr.bf16.gmra.mrb[0].mxu0 %v384
    %v531 = vpop.f32.mrb[0].mxu0
    %v532 = vadd.f32 %v407, %v531
    %v533 = vpop.f32.mrb[0].mxu0
    %v534 = vpop.f32.mrb[0].mxu0
    %v535 = vadd.f32 %v407, %v534
    %v536 = vpop.f32.mrb[0].mxu0
    %537 = vmatprep.mubr.bf16.mxu0 0
    %538 = vmatmul.mubr.bf16.gmra.mrb[0].mxu0 %v385
    %v539 = vpop.f32.mrb[0].mxu0
    %v540 = vadd.f32 %v407, %v539
    %v541 = vpop.f32.mrb[0].mxu0
    %v542 = vpop.f32.mrb[0].mxu0
    %v543 = vpop.f32.mrb[0].mxu0
    %544 = vdwg.mxu0
    %v545 = vpack.c.bf16 %v495, %v492
    %v546 = vpack.c.bf16 %v503, %v500
    %v547 = vpack.c.bf16 %v511, %v508
    %v548 = vpack.c.bf16 %v519, %v516
    %v549 = vpack.c.bf16 %v527, %v524
    %v550 = vpack.c.bf16 %v535, %v532
    %v551 = vpack.c.bf16 %v540, %v540
    %v559 = vunpack.c.l.b16 %v545
    %v560 = vunpack.c.h.b16 %v545
    %v561 = vunpack.c.l.b16 %v546
    %v562 = vunpack.c.h.b16 %v546
    %v563 = vunpack.c.l.b16 %v547
    %v564 = vunpack.c.h.b16 %v547
    %v565 = vunpack.c.l.b16 %v548
    %v566 = vunpack.c.h.b16 %v548
    %v567 = vunpack.c.l.b16 %v549
    %v568 = vunpack.c.h.b16 %v549
    %v569 = vunpack.c.l.b16 %v550
    %v570 = vunpack.c.h.b16 %v550
    %v571 = vunpack.c.l.b16 %v551
    %v572 = vpack.c.b16 %v559, %v559
    %v573 = vpack.c.b16 %v560, %v560
    %v574 = vpack.c.b16 %v561, %v561
    %v575 = vpack.c.b16 %v562, %v562
    %v576 = vpack.c.b16 %v563, %v563
    %v577 = vpack.c.b16 %v564, %v564
    %v578 = vpack.c.b16 %v565, %v565
    %v579 = vpack.c.b16 %v566, %v566
    %v580 = vpack.c.b16 %v567, %v567
    %v581 = vpack.c.b16 %v568, %v568
    %v582 = vpack.c.b16 %v569, %v569
    %v583 = vpack.c.b16 %v570, %v570
    %v584 = vpack.c.b16 %v571, %v571
    %598 = vst [vmem:[#allocation5] sm:$0xf] %v572
    %599 = vst [vmem:[#allocation5 + $0x4] sm:$0xf] %v573
    %600 = vst [vmem:[#allocation5 + $0x8] sm:$0xf] %v574
    %601 = vst [vmem:[#allocation5 + $0xc] sm:$0xf] %v575
    %602 = vst [vmem:[#allocation5 + $0x10] sm:$0xf] %v576
    %603 = vst [vmem:[#allocation5 + $0x14] sm:$0xf] %v577
    %604 = vst [vmem:[#allocation5 + $0x18] sm:$0xf] %v578
    %605 = vst [vmem:[#allocation5 + $0x1c] sm:$0xf] %v579
    %606 = vst [vmem:[#allocation5 + $0x20] sm:$0xf] %v580
    %607 = vst [vmem:[#allocation5 + $0x24] sm:$0xf] %v581
    %608 = vst [vmem:[#allocation5 + $0x28] sm:$0xf] %v582
    %609 = vst [vmem:[#allocation5 + $0x2c] sm:$0xf] %v583
    %610 = vst [vmem:[#allocation5 + $0x30] sm:$0xf] %v584
    // Predicated region
    $region34: #{tpu_custom_call.1} parent=1 // pred_check
      _
    $region35: #{tpu_custom_call.1} parent=1 // pred_check_branch
      %612 = sbr.rel (0) target = $region37
    $region36: #{tpu_custom_call.1} parent=1 // pred_region
      %s614 = ssub.s32 832, 832
      %615 = vsyncadd [#allocation4], %s614
      %s616 = sshll.u32 [#allocation5], 4
      %s617 = int_to_ptr.vmem [resolvable:$true] %s616
      %622 = dma.vmem_to_hbm [thread:$0]  %s617, 832, %s7, [#allocation4], 64, 64, 4
    $region37: #{tpu_custom_call.1} parent=1 // pred_fallthru
      _
    // Predicated region
    $region38: #{tpu_custom_call.1} parent=1 // pred_check
      _
    $region39: #{tpu_custom_call.1} parent=1 // pred_check_branch
      %624 = sbr.rel (0) target = $region41
    $region40: #{tpu_custom_call.1} parent=1 // pred_region
      %625 = dma.done [#allocation4], 832
    $region41: #{tpu_custom_call.1} parent=1 // pred_fallthru
      _
    %626 = vsyncpa [#allocation3], 1
    %627 = vsyncpa [#allocation4], 1

</llo_original>
